<compile_context>
chip_gen: v7x
topology: tpu7x:2x2x1
jax: 0.10.0
libtpu: 0.0.40
codegen_flags: <defaults>
</compile_context>

<pallas_src>
import jax
import jax.numpy as jnp
from jax.experimental import pallas as pl
from jax.experimental.pallas import tpu as pltpu


_VMEM_TILE_BUDGET = 40 * 1024 * 1024   # activation-tile budget -> headroom on v7x's 64 MiB
_VMEM_LIMIT_CAP = 56 * 1024 * 1024
_VMEM_LIMIT_FLOOR = 32 * 1024 * 1024


def _round_up(x, m):
    return ((x + m - 1) // m) * m


def _choose_seq_chunk(S, target):
    """Largest multiple-of-8 divisor of S that is <= target (or S itself)."""
    if S <= target:
        return S
    c = (target // 8) * 8
    while c >= 8:
        if S % c == 0:
            return c
        c -= 8
    return S  # no clean chunk; fall back to a single full-S block


def _inter_fusion_kernel(
    a_ref, v_ref, p_ref,
    wa_ref, ba_ref, wv_ref, bv_ref, wp_ref, bp_ref,
    wfa_ref, wfv_ref, wfp_ref, bf_ref,
    wc_ref, bc_ref,
    out_ref,
    a_acc, v_acc,
):
    s = pl.program_id(1)

    # ---- init the per-batch-tile sequence-sum accumulators ----
    @pl.when(s == 0)
    def _init():
        a_acc[...] = jnp.zeros_like(a_acc)
        v_acc[...] = jnp.zeros_like(v_acc)

    # ---- sequence-sum accumulation in f32 (the mean's 1/S is folded into wa/wv) ----
    a_acc[...] += jnp.sum(a_ref[...].astype(jnp.float32), axis=1)   # (Bt, Da)
    v_acc[...] += jnp.sum(v_ref[...].astype(jnp.float32), axis=1)   # (Bt, Dv)

    # ---- on the last sequence chunk, run the MLP stack and store the logits ----
    @pl.when(s == pl.num_programs(1) - 1)
    def _finalize():
        def encode(x_f32, w_ref, b_ref):
            y = jnp.dot(x_f32.astype(jnp.bfloat16), w_ref[...],
                        preferred_element_type=jnp.float32) + b_ref[...]
            return jnp.maximum(y, 0.0).astype(jnp.bfloat16)      # (Bt, H) bf16

        a_enc = encode(a_acc[...], wa_ref, ba_ref)
        v_enc = encode(v_acc[...], wv_ref, bv_ref)
        p_enc = encode(p_ref[...].astype(jnp.float32), wp_ref, bp_ref)

        # concat([a,v,p]) @ wf  ==  a@wf_a + v@wf_v + p@wf_p   (accumulated in f32 vregs)
        fused = (jnp.dot(a_enc, wfa_ref[...], preferred_element_type=jnp.float32)
                 + jnp.dot(v_enc, wfv_ref[...], preferred_element_type=jnp.float32)
                 + jnp.dot(p_enc, wfp_ref[...], preferred_element_type=jnp.float32)
                 + bf_ref[...])
        fused = jnp.maximum(fused, 0.0)

        logits = jnp.dot(fused.astype(jnp.bfloat16), wc_ref[...],
                         preferred_element_type=jnp.float32) + bc_ref[...]
        out_ref[...] = logits.astype(out_ref.dtype)


def prepare_params(params, seq_len):
    """One-time weight preparation (do NOT call per inference step).

    Folds the 1/S of the sequence mean into the audio/video encoder weights, casts
    all MXU operands to bf16, splits the fusion weight into per-modality slices, and
    lane-pads the classifier to a multiple of 128 for an unmasked output store.
    """
    H = params["wa"].shape[1]
    F = params["wf"].shape[1]
    C = params["wc"].shape[1]
    Cp = _round_up(C, 128)
    inv_s = jnp.float32(1.0 / seq_len)
    wf = params["wf"]

    prep = dict(
        wa=(params["wa"] * inv_s).astype(jnp.bfloat16),
        ba=params["ba"][None, :].astype(jnp.float32),
        wv=(params["wv"] * inv_s).astype(jnp.bfloat16),
        bv=params["bv"][None, :].astype(jnp.float32),
        wp=params["wp"].astype(jnp.bfloat16),
        bp=params["bp"][None, :].astype(jnp.float32),
        wfa=wf[0:H].astype(jnp.bfloat16),
        wfv=wf[H:2 * H].astype(jnp.bfloat16),
        wfp=wf[2 * H:3 * H].astype(jnp.bfloat16),
        bf=params["bf"][None, :].astype(jnp.float32),
        wc=jnp.zeros((F, Cp), jnp.bfloat16).at[:, :C].set(params["wc"].astype(jnp.bfloat16)),
        bc=jnp.zeros((1, Cp), jnp.float32).at[:, :C].set(params["bc"].astype(jnp.float32)),
        num_classes=int(C),
        seq_len=int(seq_len),
    )
    return prep


def intermediate_fusion_mlp(A_feat, V_feat, P_feat, prep, *,
                            batch_tile=512, seq_chunk=256):
    """Fused IntermediateFusionMLP forward (eval mode: dropout = identity).

    A_feat: [B, S, Da], V_feat: [B, S, Dv], P_feat: [B, Dp] (or [Dp]).
    `prep` is the output of prepare_params (computed once, reused every call).
    """
    if P_feat.ndim == 1:
        P_feat = P_feat[None, :]

    B, S, Da = A_feat.shape
    Dv = V_feat.shape[-1]
    Dp = P_feat.shape[-1]
    if S != prep["seq_len"]:
        raise ValueError(f"prepare_params was built for seq_len={prep['seq_len']}, got {S}")

    Cp = prep["wc"].shape[1]
    C = prep["num_classes"]

    # ---- tile selection -------------------------------------------------------
    # Sequence chunk: multiple of 8 that divides S (or the whole axis).
    Sc = _choose_seq_chunk(S, seq_chunk)

    # Batch tile: multiple of 8, <= batch_tile, and small enough that the batch grid
    # has >= 2 steps whenever B allows it (keeps both v7x TensorCores busy).
    Bt = max(8, min(_round_up(batch_tile, 8), _round_up(pl.cdiv(B, 2), 8)))

    resident_names = ("wa", "ba", "wv", "bv", "wp", "bp",
                      "wfa", "wfv", "wfp", "bf", "wc", "bc")
    weight_bytes = sum(prep[k].size * prep[k].dtype.itemsize for k in resident_names)

    def vmem_estimate(bt, sc):
        stream = 2 * bt * sc * (Da * A_feat.dtype.itemsize          # double-buffered A tile
                                + Dv * V_feat.dtype.itemsize)       # double-buffered V tile
        small = 2 * bt * (Dp * P_feat.dtype.itemsize + Cp * 4)      # P tile + f32 output tile
        scratch = bt * (Da + Dv) * 4                                # f32 seq-sum accumulators
        return stream + small + scratch + 2 * weight_bytes          # weights double-buffered

    while Bt > 8 and vmem_estimate(Bt, Sc) > _VMEM_TILE_BUDGET:
        Bt = max(8, _round_up(Bt // 2, 8))

    vmem_limit = int(min(_VMEM_LIMIT_CAP,
                         max(_VMEM_LIMIT_FLOOR, vmem_estimate(Bt, Sc) + 8 * 1024 * 1024)))

    nb = pl.cdiv(B, Bt)       # ragged last batch block: no input padding needed
    ns = S // Sc              # Sc always divides S by construction
    Bp = nb * Bt              # output allocated padded -> all output stores are full blocks

    # ---- specs ----------------------------------------------------------------
    def resident(arr):
        nd = arr.ndim
        return pl.BlockSpec(arr.shape, lambda i, s, _nd=nd: (0,) * _nd)

    in_specs = [
        pl.BlockSpec((Bt, Sc, Da), lambda i, s: (i, s, 0)),   # audio tile (streamed)
        pl.BlockSpec((Bt, Sc, Dv), lambda i, s: (i, s, 0)),   # video tile (streamed)
        pl.BlockSpec((Bt, Dp), lambda i, s: (i, 0)),          # personalized tile
        resident(prep["wa"]), resident(prep["ba"]),
        resident(prep["wv"]), resident(prep["bv"]),
        resident(prep["wp"]), resident(prep["bp"]),
        resident(prep["wfa"]), resident(prep["wfv"]), resident(prep["wfp"]),
        resident(prep["bf"]),
        resident(prep["wc"]), resident(prep["bc"]),
    ]
    out_spec = pl.BlockSpec((Bt, Cp), lambda i, s: (i, 0))    # resident across the seq axis

    out = pl.pallas_call(
        _inter_fusion_kernel,
        out_shape=jax.ShapeDtypeStruct((Bp, Cp), jnp.float32),
        grid=(nb, ns),
        in_specs=in_specs,
        out_specs=out_spec,
        scratch_shapes=[
            pltpu.VMEM((Bt, Da), jnp.float32),   # audio seq-sum accumulator
            pltpu.VMEM((Bt, Dv), jnp.float32),   # video seq-sum accumulator
        ],
        compiler_params=pltpu.CompilerParams(
            dimension_semantics=("parallel", "arbitrary"),   # batch tiles independent
            vmem_limit_bytes=vmem_limit,
        ),
    )(A_feat, V_feat, P_feat,
      prep["wa"], prep["ba"], prep["wv"], prep["bv"], prep["wp"], prep["bp"],
      prep["wfa"], prep["wfv"], prep["wfp"], prep["bf"],
      prep["wc"], prep["bc"])

    return out[:B, :C]


def init_params(key, audio_dim, video_dim, pers_dim, modality_hidden_dim,
                fusion_hidden_dim, num_classes):
    """Deterministic synthetic parameter init (weights stored as (in, out))."""
    ks = jax.random.split(key, 5)

    def lin(k, fan_in, fan_out):
        bound = 1.0 / jnp.sqrt(fan_in)
        kw, kb = jax.random.split(k)
        w = jax.random.uniform(kw, (fan_in, fan_out), jnp.float32, -bound, bound)
        b = jax.random.uniform(kb, (fan_out,), jnp.float32, -bound, bound)
        return w, b

    wa, ba = lin(ks[0], audio_dim, modality_hidden_dim)
    wv, bv = lin(ks[1], video_dim, modality_hidden_dim)
    wp, bp = lin(ks[2], pers_dim, modality_hidden_dim)
    wf, bf = lin(ks[3], 3 * modality_hidden_dim, fusion_hidden_dim)
    wc, bc = lin(ks[4], fusion_hidden_dim, num_classes)
    return dict(wa=wa, ba=ba, wv=wv, bv=bv, wp=wp, bp=bp, wf=wf, bf=bf,
                wc=wc, bc=bc)


def reference_forward(A_feat, V_feat, P_feat, params):
    """Plain-JAX f32 reference mirroring the PyTorch forward (eval mode)."""
    a = jnp.mean(A_feat, axis=1)
    v = jnp.mean(V_feat, axis=1)
    relu = lambda x: jnp.maximum(x, 0.0)
    a_e = relu(a @ params["wa"] + params["ba"])
    v_e = relu(v @ params["wv"] + params["bv"])
    p_e = relu(P_feat @ params["wp"] + params["bp"])
    fused = relu(jnp.concatenate([a_e, v_e, p_e], axis=1) @ params["wf"] + params["bf"])
    return fused @ params["wc"] + params["bc"]


if __name__ == "__main__":
    # Small shapes consistent with the module's forward signature.
    B, S = 2, 8
    audio_dim, video_dim, pers_dim = 24, 40, 16
    modality_hidden_dim, fusion_hidden_dim, num_classes = 32, 64, 6

    key = jax.random.PRNGKey(0)
    k_a, k_v, k_p, k_params = jax.random.split(key, 4)

    A_feat = jax.random.normal(k_a, (B, S, audio_dim), jnp.float32)
    V_feat = jax.random.normal(k_v, (B, S, video_dim), jnp.float32)
    P_feat = jax.random.normal(k_p, (B, pers_dim), jnp.float32)

    params = init_params(k_params, audio_dim, video_dim, pers_dim,
                         modality_hidden_dim, fusion_hidden_dim, num_classes)

    # One-time weight preparation, hoisted out of the inference hot path.
    prep = prepare_params(params, seq_len=S)

    fwd = jax.jit(lambda a, v, p: intermediate_fusion_mlp(a, v, p, prep))
    logits = fwd(A_feat, V_feat, P_feat)
    jax.block_until_ready(logits)

    ref = reference_forward(A_feat, V_feat, P_feat, params)
    assert logits.shape == (B, num_classes)
    # bf16 MXU operands (f32 accumulation) -> relaxed tolerance vs. the f32 reference.
    assert jnp.allclose(logits, ref, atol=3e-2, rtol=3e-2), (
        float(jnp.max(jnp.abs(logits - ref))))

    print("KERNEL_OK")
</pallas_src>

<mosaic_0001>
module attributes {stable_mosaic.version = 11 : i64} {
  func.func @_inter_fusion_kernel(%arg0: i32, %arg1: i32, %arg2: memref<8x8x24xf32, #tpu.memory_space<vmem>>, %arg3: memref<8x8x40xf32, #tpu.memory_space<vmem>>, %arg4: memref<8x16xf32, #tpu.memory_space<vmem>>, %arg5: memref<24x32xbf16, #tpu.memory_space<vmem>>, %arg6: memref<1x32xf32, #tpu.memory_space<vmem>>, %arg7: memref<40x32xbf16, #tpu.memory_space<vmem>>, %arg8: memref<1x32xf32, #tpu.memory_space<vmem>>, %arg9: memref<16x32xbf16, #tpu.memory_space<vmem>>, %arg10: memref<1x32xf32, #tpu.memory_space<vmem>>, %arg11: memref<32x64xbf16, #tpu.memory_space<vmem>>, %arg12: memref<32x64xbf16, #tpu.memory_space<vmem>>, %arg13: memref<32x64xbf16, #tpu.memory_space<vmem>>, %arg14: memref<1x64xf32, #tpu.memory_space<vmem>>, %arg15: memref<64x128xbf16, #tpu.memory_space<vmem>>, %arg16: memref<1x128xf32, #tpu.memory_space<vmem>>, %arg17: memref<8x128xf32, #tpu.memory_space<vmem>>, %arg18: memref<8x24xf32, #tpu.memory_space<vmem>>, %arg19: memref<8x40xf32, #tpu.memory_space<vmem>>) attributes {dimension_semantics = [#tpu.dimension_semantics<parallel>, #tpu.dimension_semantics<arbitrary>], iteration_bounds = array<i64: 1, 1>, scalar_prefetch = 0 : i64, scratch_operands = 2 : i64, tpu.core_type = #tpu.core_type<tc>, window_params = [{transform_indices = @transform_0, window_bounds = array<i64: 8, 8, 24>}, {transform_indices = @transform_1, window_bounds = array<i64: 8, 8, 40>}, {transform_indices = @transform_2, window_bounds = array<i64: 8, 16>}, {pipeline_mode = #tpu.pipeline_mode<synchronous>, transform_indices = @transform_3, window_bounds = array<i64: 24, 32>}, {pipeline_mode = #tpu.pipeline_mode<synchronous>, transform_indices = @transform_4, window_bounds = array<i64: 1, 32>}, {pipeline_mode = #tpu.pipeline_mode<synchronous>, transform_indices = @transform_5, window_bounds = array<i64: 40, 32>}, {pipeline_mode = #tpu.pipeline_mode<synchronous>, transform_indices = @transform_6, window_bounds = array<i64: 1, 32>}, {pipeline_mode = #tpu.pipeline_mode<synchronous>, transform_indices = @transform_7, window_bounds = array<i64: 16, 32>}, {pipeline_mode = #tpu.pipeline_mode<synchronous>, transform_indices = @transform_8, window_bounds = array<i64: 1, 32>}, {pipeline_mode = #tpu.pipeline_mode<synchronous>, transform_indices = @transform_9, window_bounds = array<i64: 32, 64>}, {pipeline_mode = #tpu.pipeline_mode<synchronous>, transform_indices = @transform_10, window_bounds = array<i64: 32, 64>}, {pipeline_mode = #tpu.pipeline_mode<synchronous>, transform_indices = @transform_11, window_bounds = array<i64: 32, 64>}, {pipeline_mode = #tpu.pipeline_mode<synchronous>, transform_indices = @transform_12, window_bounds = array<i64: 1, 64>}, {pipeline_mode = #tpu.pipeline_mode<synchronous>, transform_indices = @transform_13, window_bounds = array<i64: 64, 128>}, {pipeline_mode = #tpu.pipeline_mode<synchronous>, transform_indices = @transform_14, window_bounds = array<i64: 1, 128>}, {transform_indices = @transform_15, window_bounds = array<i64: 8, 128>}]} {
    %c0_i32 = arith.constant 0 : i32
    %0 = arith.cmpi eq, %arg1, %c0_i32 : i32
    %1 = arith.extui %0 : i1 to i32
    %c0_i32_0 = arith.constant 0 : i32
    %2 = arith.cmpi ne, %1, %c0_i32_0 : i32
    scf.if %2 {
      %cst_17 = arith.constant 0.000000e+00 : f32
      %16 = vector.broadcast %cst_17 : f32 to vector<8x24xf32>
      %c0_18 = arith.constant 0 : index
      %c0_19 = arith.constant 0 : index
      %17 = vector.load %arg18[%c0_18, %c0_19] : memref<8x24xf32, #tpu.memory_space<vmem>>, vector<8x24xf32>
      tpu.vector_store %arg18[%c0_18, %c0_19], %16 {strides = array<i32>} : memref<8x24xf32, #tpu.memory_space<vmem>>, vector<8x24xf32>,
      %cst_20 = arith.constant 0.000000e+00 : f32
      %18 = vector.broadcast %cst_20 : f32 to vector<8x40xf32>
      %c0_21 = arith.constant 0 : index
      %c0_22 = arith.constant 0 : index
      %19 = vector.load %arg19[%c0_21, %c0_22] : memref<8x40xf32, #tpu.memory_space<vmem>>, vector<8x40xf32>
      tpu.vector_store %arg19[%c0_21, %c0_22], %18 {strides = array<i32>} : memref<8x40xf32, #tpu.memory_space<vmem>>, vector<8x40xf32>,
    } else {
    }
    %c0 = arith.constant 0 : index
    %c0_1 = arith.constant 0 : index
    %3 = vector.load %arg18[%c0, %c0_1] : memref<8x24xf32, #tpu.memory_space<vmem>>, vector<8x24xf32>
    %c0_2 = arith.constant 0 : index
    %c0_3 = arith.constant 0 : index
    %c0_4 = arith.constant 0 : index
    %4 = vector.load %arg2[%c0_2, %c0_3, %c0_4] : memref<8x8x24xf32, #tpu.memory_space<vmem>>, vector<8x8x24xf32>
    %cst = arith.constant dense<0.000000e+00> : vector<8x24xf32>
    %5 = vector.multi_reduction <add>, %4, %cst [1] : vector<8x8x24xf32> to vector<8x24xf32>
    %6 = arith.addf %3, %5 : vector<8x24xf32>
    %c0_5 = arith.constant 0 : index
    %c0_6 = arith.constant 0 : index
    %7 = vector.load %arg18[%c0_5, %c0_6] : memref<8x24xf32, #tpu.memory_space<vmem>>, vector<8x24xf32>
    tpu.vector_store %arg18[%c0_5, %c0_6], %6 {strides = array<i32>} : memref<8x24xf32, #tpu.memory_space<vmem>>, vector<8x24xf32>,
    %c0_7 = arith.constant 0 : index
    %c0_8 = arith.constant 0 : index
    %8 = vector.load %arg19[%c0_7, %c0_8] : memref<8x40xf32, #tpu.memory_space<vmem>>, vector<8x40xf32>
    %c0_9 = arith.constant 0 : index
    %c0_10 = arith.constant 0 : index
    %c0_11 = arith.constant 0 : index
    %9 = vector.load %arg3[%c0_9, %c0_10, %c0_11] : memref<8x8x40xf32, #tpu.memory_space<vmem>>, vector<8x8x40xf32>
    %cst_12 = arith.constant dense<0.000000e+00> : vector<8x40xf32>
    %10 = vector.multi_reduction <add>, %9, %cst_12 [1] : vector<8x8x40xf32> to vector<8x40xf32>
    %11 = arith.addf %8, %10 : vector<8x40xf32>
    %c0_13 = arith.constant 0 : index
    %c0_14 = arith.constant 0 : index
    %12 = vector.load %arg19[%c0_13, %c0_14] : memref<8x40xf32, #tpu.memory_space<vmem>>, vector<8x40xf32>
    tpu.vector_store %arg19[%c0_13, %c0_14], %11 {strides = array<i32>} : memref<8x40xf32, #tpu.memory_space<vmem>>, vector<8x40xf32>,
    %c0_i32_15 = arith.constant 0 : i32
    %13 = arith.cmpi eq, %arg1, %c0_i32_15 : i32
    %14 = arith.extui %13 : i1 to i32
    %c0_i32_16 = arith.constant 0 : i32
    %15 = arith.cmpi ne, %14, %c0_i32_16 : i32
    scf.if %15 {
      %c0_17 = arith.constant 0 : index
      %c0_18 = arith.constant 0 : index
      %16 = vector.load %arg18[%c0_17, %c0_18] : memref<8x24xf32, #tpu.memory_space<vmem>>, vector<8x24xf32>
      %17 = arith.truncf %16 : vector<8x24xf32> to vector<8x24xbf16>
      %c0_19 = arith.constant 0 : index
      %c0_20 = arith.constant 0 : index
      %18 = vector.load %arg5[%c0_19, %c0_20] : memref<24x32xbf16, #tpu.memory_space<vmem>>, vector<24x32xbf16>
      %cst_21 = arith.constant dense<0.000000e+00> : vector<8x32xf32>
      %19 = tpu.matmul %17, %18, %cst_21 {dimension_numbers = #tpu.dot_dimension_numbers<[1], [0], [0], [1], [0, 0, 1, 1], [], []>} : vector<8x24xbf16>, vector<24x32xbf16>, vector<8x32xf32> -> vector<8x32xf32>
      %c0_22 = arith.constant 0 : index
      %c0_23 = arith.constant 0 : index
      %20 = vector.load %arg6[%c0_22, %c0_23] : memref<1x32xf32, #tpu.memory_space<vmem>>, vector<1x32xf32>
      %21 = vector.broadcast %20 : vector<1x32xf32> to vector<8x32xf32>
      %22 = arith.addf %19, %21 : vector<8x32xf32>
      %cst_24 = arith.constant 0.000000e+00 : f32
      %23 = vector.broadcast %cst_24 : f32 to vector<8x32xf32>
      %24 = arith.maximumf %22, %23 : vector<8x32xf32>
      %25 = arith.truncf %24 : vector<8x32xf32> to vector<8x32xbf16>
      %c0_25 = arith.constant 0 : index
      %c0_26 = arith.constant 0 : index
      %26 = vector.load %arg19[%c0_25, %c0_26] : memref<8x40xf32, #tpu.memory_space<vmem>>, vector<8x40xf32>
      %27 = arith.truncf %26 : vector<8x40xf32> to vector<8x40xbf16>
      %c0_27 = arith.constant 0 : index
      %c0_28 = arith.constant 0 : index
      %28 = vector.load %arg7[%c0_27, %c0_28] : memref<40x32xbf16, #tpu.memory_space<vmem>>, vector<40x32xbf16>
      %cst_29 = arith.constant dense<0.000000e+00> : vector<8x32xf32>
      %29 = tpu.matmul %27, %28, %cst_29 {dimension_numbers = #tpu.dot_dimension_numbers<[1], [0], [0], [1], [0, 0, 1, 1], [], []>} : vector<8x40xbf16>, vector<40x32xbf16>, vector<8x32xf32> -> vector<8x32xf32>
      %c0_30 = arith.constant 0 : index
      %c0_31 = arith.constant 0 : index
      %30 = vector.load %arg8[%c0_30, %c0_31] : memref<1x32xf32, #tpu.memory_space<vmem>>, vector<1x32xf32>
      %31 = vector.broadcast %30 : vector<1x32xf32> to vector<8x32xf32>
      %32 = arith.addf %29, %31 : vector<8x32xf32>
      %cst_32 = arith.constant 0.000000e+00 : f32
      %33 = vector.broadcast %cst_32 : f32 to vector<8x32xf32>
      %34 = arith.maximumf %32, %33 : vector<8x32xf32>
      %35 = arith.truncf %34 : vector<8x32xf32> to vector<8x32xbf16>
      %c0_33 = arith.constant 0 : index
      %c0_34 = arith.constant 0 : index
      %36 = vector.load %arg4[%c0_33, %c0_34] : memref<8x16xf32, #tpu.memory_space<vmem>>, vector<8x16xf32>
      %37 = arith.truncf %36 : vector<8x16xf32> to vector<8x16xbf16>
      %c0_35 = arith.constant 0 : index
      %c0_36 = arith.constant 0 : index
      %38 = vector.load %arg9[%c0_35, %c0_36] : memref<16x32xbf16, #tpu.memory_space<vmem>>, vector<16x32xbf16>
      %cst_37 = arith.constant dense<0.000000e+00> : vector<8x32xf32>
      %39 = tpu.matmul %37, %38, %cst_37 {dimension_numbers = #tpu.dot_dimension_numbers<[1], [0], [0], [1], [0, 0, 1, 1], [], []>} : vector<8x16xbf16>, vector<16x32xbf16>, vector<8x32xf32> -> vector<8x32xf32>
      %c0_38 = arith.constant 0 : index
      %c0_39 = arith.constant 0 : index
      %40 = vector.load %arg10[%c0_38, %c0_39] : memref<1x32xf32, #tpu.memory_space<vmem>>, vector<1x32xf32>
      %41 = vector.broadcast %40 : vector<1x32xf32> to vector<8x32xf32>
      %42 = arith.addf %39, %41 : vector<8x32xf32>
      %cst_40 = arith.constant 0.000000e+00 : f32
      %43 = vector.broadcast %cst_40 : f32 to vector<8x32xf32>
      %44 = arith.maximumf %42, %43 : vector<8x32xf32>
      %45 = arith.truncf %44 : vector<8x32xf32> to vector<8x32xbf16>
      %c0_41 = arith.constant 0 : index
      %c0_42 = arith.constant 0 : index
      %46 = vector.load %arg11[%c0_41, %c0_42] : memref<32x64xbf16, #tpu.memory_space<vmem>>, vector<32x64xbf16>
      %cst_43 = arith.constant dense<0.000000e+00> : vector<8x64xf32>
      %47 = tpu.matmul %25, %46, %cst_43 {dimension_numbers = #tpu.dot_dimension_numbers<[1], [0], [0], [1], [0, 0, 1, 1], [], []>} : vector<8x32xbf16>, vector<32x64xbf16>, vector<8x64xf32> -> vector<8x64xf32>
      %c0_44 = arith.constant 0 : index
      %c0_45 = arith.constant 0 : index
      %48 = vector.load %arg12[%c0_44, %c0_45] : memref<32x64xbf16, #tpu.memory_space<vmem>>, vector<32x64xbf16>
      %cst_46 = arith.constant dense<0.000000e+00> : vector<8x64xf32>
      %49 = tpu.matmul %35, %48, %cst_46 {dimension_numbers = #tpu.dot_dimension_numbers<[1], [0], [0], [1], [0, 0, 1, 1], [], []>} : vector<8x32xbf16>, vector<32x64xbf16>, vector<8x64xf32> -> vector<8x64xf32>
      %50 = arith.addf %47, %49 : vector<8x64xf32>
      %c0_47 = arith.constant 0 : index
      %c0_48 = arith.constant 0 : index
      %51 = vector.load %arg13[%c0_47, %c0_48] : memref<32x64xbf16, #tpu.memory_space<vmem>>, vector<32x64xbf16>
      %cst_49 = arith.constant dense<0.000000e+00> : vector<8x64xf32>
      %52 = tpu.matmul %45, %51, %cst_49 {dimension_numbers = #tpu.dot_dimension_numbers<[1], [0], [0], [1], [0, 0, 1, 1], [], []>} : vector<8x32xbf16>, vector<32x64xbf16>, vector<8x64xf32> -> vector<8x64xf32>
      %53 = arith.addf %50, %52 : vector<8x64xf32>
      %c0_50 = arith.constant 0 : index
      %c0_51 = arith.constant 0 : index
      %54 = vector.load %arg14[%c0_50, %c0_51] : memref<1x64xf32, #tpu.memory_space<vmem>>, vector<1x64xf32>
      %55 = vector.broadcast %54 : vector<1x64xf32> to vector<8x64xf32>
      %56 = arith.addf %53, %55 : vector<8x64xf32>
      %cst_52 = arith.constant 0.000000e+00 : f32
      %57 = vector.broadcast %cst_52 : f32 to vector<8x64xf32>
      %58 = arith.maximumf %56, %57 : vector<8x64xf32>
      %59 = arith.truncf %58 : vector<8x64xf32> to vector<8x64xbf16>
      %c0_53 = arith.constant 0 : index
      %c0_54 = arith.constant 0 : index
      %60 = vector.load %arg15[%c0_53, %c0_54] : memref<64x128xbf16, #tpu.memory_space<vmem>>, vector<64x128xbf16>
      %cst_55 = arith.constant dense<0.000000e+00> : vector<8x128xf32>
      %61 = tpu.matmul %59, %60, %cst_55 {dimension_numbers = #tpu.dot_dimension_numbers<[1], [0], [0], [1], [0, 0, 1, 1], [], []>} : vector<8x64xbf16>, vector<64x128xbf16>, vector<8x128xf32> -> vector<8x128xf32>
      %c0_56 = arith.constant 0 : index
      %c0_57 = arith.constant 0 : index
      %62 = vector.load %arg16[%c0_56, %c0_57] : memref<1x128xf32, #tpu.memory_space<vmem>>, vector<1x128xf32>
      %63 = vector.broadcast %62 : vector<1x128xf32> to vector<8x128xf32>
      %64 = arith.addf %61, %63 : vector<8x128xf32>
      %c0_58 = arith.constant 0 : index
      %c0_59 = arith.constant 0 : index
      %65 = vector.load %arg17[%c0_58, %c0_59] : memref<8x128xf32, #tpu.memory_space<vmem>>, vector<8x128xf32>
      tpu.vector_store %arg17[%c0_58, %c0_59], %64 {strides = array<i32>} : memref<8x128xf32, #tpu.memory_space<vmem>>, vector<8x128xf32>,
    } else {
    }
    return
  }
  func.func @transform_0(%arg0: i32, %arg1: i32) -> (i32, i32, i32) {
    %c0_i32 = arith.constant 0 : i32
    %c0_i32_0 = arith.constant 0 : i32
    return %arg0, %arg1, %c0_i32 : i32, i32, i32
  }
  func.func @transform_1(%arg0: i32, %arg1: i32) -> (i32, i32, i32) {
    %c0_i32 = arith.constant 0 : i32
    %c0_i32_0 = arith.constant 0 : i32
    return %arg0, %arg1, %c0_i32 : i32, i32, i32
  }
  func.func @transform_2(%arg0: i32, %arg1: i32) -> (i32, i32) {
    %c0_i32 = arith.constant 0 : i32
    %c0_i32_0 = arith.constant 0 : i32
    return %arg0, %c0_i32 : i32, i32
  }
  func.func @transform_3(%arg0: i32, %arg1: i32) -> (i32, i32) {
    %c0_i32 = arith.constant 0 : i32
    %c0_i32_0 = arith.constant 0 : i32
    %c0_i32_1 = arith.constant 0 : i32
    return %c0_i32, %c0_i32_0 : i32, i32
  }
  func.func @transform_4(%arg0: i32, %arg1: i32) -> (i32, i32) {
    %c0_i32 = arith.constant 0 : i32
    %c0_i32_0 = arith.constant 0 : i32
    %c0_i32_1 = arith.constant 0 : i32
    return %c0_i32, %c0_i32_0 : i32, i32
  }
  func.func @transform_5(%arg0: i32, %arg1: i32) -> (i32, i32) {
    %c0_i32 = arith.constant 0 : i32
    %c0_i32_0 = arith.constant 0 : i32
    %c0_i32_1 = arith.constant 0 : i32
    return %c0_i32, %c0_i32_0 : i32, i32
  }
  func.func @transform_6(%arg0: i32, %arg1: i32) -> (i32, i32) {
    %c0_i32 = arith.constant 0 : i32
    %c0_i32_0 = arith.constant 0 : i32
    %c0_i32_1 = arith.constant 0 : i32
    return %c0_i32, %c0_i32_0 : i32, i32
  }
  func.func @transform_7(%arg0: i32, %arg1: i32) -> (i32, i32) {
    %c0_i32 = arith.constant 0 : i32
    %c0_i32_0 = arith.constant 0 : i32
    %c0_i32_1 = arith.constant 0 : i32
    return %c0_i32, %c0_i32_0 : i32, i32
  }
  func.func @transform_8(%arg0: i32, %arg1: i32) -> (i32, i32) {
    %c0_i32 = arith.constant 0 : i32
    %c0_i32_0 = arith.constant 0 : i32
    %c0_i32_1 = arith.constant 0 : i32
    return %c0_i32, %c0_i32_0 : i32, i32
  }
  func.func @transform_9(%arg0: i32, %arg1: i32) -> (i32, i32) {
    %c0_i32 = arith.constant 0 : i32
    %c0_i32_0 = arith.constant 0 : i32
    %c0_i32_1 = arith.constant 0 : i32
    return %c0_i32, %c0_i32_0 : i32, i32
  }
  func.func @transform_10(%arg0: i32, %arg1: i32) -> (i32, i32) {
    %c0_i32 = arith.constant 0 : i32
    %c0_i32_0 = arith.constant 0 : i32
    %c0_i32_1 = arith.constant 0 : i32
    return %c0_i32, %c0_i32_0 : i32, i32
  }
  func.func @transform_11(%arg0: i32, %arg1: i32) -> (i32, i32) {
    %c0_i32 = arith.constant 0 : i32
    %c0_i32_0 = arith.constant 0 : i32
    %c0_i32_1 = arith.constant 0 : i32
    return %c0_i32, %c0_i32_0 : i32, i32
  }
  func.func @transform_12(%arg0: i32, %arg1: i32) -> (i32, i32) {
    %c0_i32 = arith.constant 0 : i32
    %c0_i32_0 = arith.constant 0 : i32
    %c0_i32_1 = arith.constant 0 : i32
    return %c0_i32, %c0_i32_0 : i32, i32
  }
  func.func @transform_13(%arg0: i32, %arg1: i32) -> (i32, i32) {
    %c0_i32 = arith.constant 0 : i32
    %c0_i32_0 = arith.constant 0 : i32
    %c0_i32_1 = arith.constant 0 : i32
    return %c0_i32, %c0_i32_0 : i32, i32
  }
  func.func @transform_14(%arg0: i32, %arg1: i32) -> (i32, i32) {
    %c0_i32 = arith.constant 0 : i32
    %c0_i32_0 = arith.constant 0 : i32
    %c0_i32_1 = arith.constant 0 : i32
    return %c0_i32, %c0_i32_0 : i32, i32
  }
  func.func @transform_15(%arg0: i32, %arg1: i32) -> (i32, i32) {
    %c0_i32 = arith.constant 0 : i32
    %c0_i32_0 = arith.constant 0 : i32
    return %arg0, %c0_i32 : i32, i32
  }
}

</mosaic_0001>

<llo_original>
// kernel: _lambda_.1
$region0: #{_lambda_.1}
  #allocation0 [shape = 'u32[]', space=smem, size = 0x4, offset = 0x4, fixed_abs, tag = 'smem constant byte address 0x4 - core index']
  #allocation1 [shape = 'u32[144,128]{1,0:T(1,128)}', space=vmem, size = 0x12000, scoped, tag = 'internal scratch']
  #allocation2 [shape = 'f32[8,24]{1,0:T(8,128)}', space=vmem, size = 0x1000, scoped, tag = 'scratch operand']
  #allocation3 [shape = 'f32[8,40]{1,0:T(8,128)}', space=vmem, size = 0x1000, scoped, tag = 'scratch operand']
  %s0 = inlined_call_operand.hbm [shape: f32[2,8,24], index: 0, kind: input, shape index: {}]
  %s1 = inlined_call_operand.hbm [shape: f32[2,8,40], index: 1, kind: input, shape index: {}]
  %s2 = inlined_call_operand.hbm [shape: f32[2,16], index: 2, kind: input, shape index: {}]
  %s3 = inlined_call_operand.hbm [shape: bf16[24,32], index: 3, kind: input, shape index: {}]
  %s4 = inlined_call_operand.hbm [shape: f32[1,32], index: 4, kind: input, shape index: {}]
  %s5 = inlined_call_operand.vmem [shape: bf16[40,32], index: 5, kind: input, shape index: {}]
  %s6 = inlined_call_operand.hbm [shape: f32[1,32], index: 6, kind: input, shape index: {}]
  %s7 = inlined_call_operand.hbm [shape: bf16[16,32], index: 7, kind: input, shape index: {}]
  %s8 = inlined_call_operand.hbm [shape: f32[1,32], index: 8, kind: input, shape index: {}]
  %s9 = inlined_call_operand.hbm [shape: bf16[32,64], index: 9, kind: input, shape index: {}]
  %s10 = inlined_call_operand.hbm [shape: bf16[32,64], index: 10, kind: input, shape index: {}]
  %s11 = inlined_call_operand.vmem [shape: bf16[32,64], index: 11, kind: input, shape index: {}]
  %s12 = inlined_call_operand.hbm [shape: f32[1,64], index: 12, kind: input, shape index: {}]
  %s13 = inlined_call_operand.vmem [shape: bf16[64,128], index: 13, kind: input, shape index: {}]
  %s14 = inlined_call_operand.hbm [shape: f32[1,128], index: 14, kind: input, shape index: {}]
  %s15 = inlined_call_operand.vmem [shape: f32[8,128], index: 15, kind: output, shape index: {}]
  %s16 = sld [smem:[#allocation0]]
  $region126: #{_lambda_.1} parent=0
    _
  %s18 = ssub.s32 1, %s16
  %s19 = scalar_select 0, %s18, %s16
  $region1: #{_lambda_.1} parent=0
    #allocation4 [shape = 'u8[32768]{0}', space=vmem, size = 0x8000, scoped, tag = 'input window, operand 0, single buffered']
    #allocation5 [shape = 's32[1]{0}', space=sflag, size = 0x4, scoped, tag = 'scoped memory for _lambda_.1']
    #allocation6 [shape = 'u8[32768]{0}', space=vmem, size = 0x8000, scoped, tag = 'input window, operand 1, single buffered']
    #allocation7 [shape = 's32[1]{0}', space=sflag, size = 0x4, scoped, tag = 'scoped memory for _lambda_.1']
    #allocation8 [shape = 'u8[4096]{0}', space=vmem, size = 0x1000, scoped, tag = 'input window, operand 2, single buffered']
    #allocation9 [shape = 'u8[6144]{0}', space=vmem, size = 0x1800, scoped, tag = 'input window, operand 3, single buffered']
    #allocation10 [shape = 's32[1]{0}', space=sflag, size = 0x4, scoped, tag = 'scoped memory for _lambda_.1']
    #allocation11 [shape = 'u8[512]{0}', space=vmem, size = 0x400, scoped, tag = 'input window, operand 4, single buffered']
    #allocation12 [shape = 'u8[512]{0}', space=vmem, size = 0x400, scoped, tag = 'input window, operand 6, single buffered']
    #allocation13 [shape = 's32[1]{0}', space=sflag, size = 0x4, scoped, tag = 'scoped memory for _lambda_.1']
    #allocation14 [shape = 'u8[4096]{0}', space=vmem, size = 0x1000, scoped, tag = 'input window, operand 7, single buffered']
    #allocation15 [shape = 'u8[512]{0}', space=vmem, size = 0x400, scoped, tag = 'input window, operand 8, single buffered']
    #allocation16 [shape = 's32[1]{0}', space=sflag, size = 0x4, scoped, tag = 'scoped memory for _lambda_.1']
    #allocation17 [shape = 'u8[8192]{0}', space=vmem, size = 0x2000, scoped, tag = 'input window, operand 9, single buffered']
    #allocation18 [shape = 'u8[8192]{0}', space=vmem, size = 0x2000, scoped, tag = 'input window, operand 10, single buffered']
    #allocation19 [shape = 's32[1]{0}', space=sflag, size = 0x4, scoped, tag = 'scoped memory for _lambda_.1']
    #allocation20 [shape = 'u8[512]{0}', space=vmem, size = 0x400, scoped, tag = 'input window, operand 12, single buffered']
    #allocation21 [shape = 'u8[512]{0}', space=vmem, size = 0x400, scoped, tag = 'input window, operand 14, single buffered']
    #allocation22 [shape = 's32[1]{0}', space=sflag, size = 0x4, scoped, tag = 'scoped memory for _lambda_.1']
    %20 = vsyncpa [#allocation5], 0
    %21 = vsyncpa [#allocation7], 0
    %22 = vsyncpa [#allocation10], 0
    %23 = vsyncpa [#allocation13], 0
    %24 = vsyncpa [#allocation16], 0
    %25 = vsyncpa [#allocation19], 0
    %26 = vsyncpa [#allocation22], 0
    // Predicated region
    $region2: #{_lambda_.1} parent=1 // pred_check
      _
    $region3: #{_lambda_.1} parent=1 // pred_check_branch
      %28 = sbr.rel (0) target = $region5
    $region4: #{_lambda_.1} parent=1 // pred_region
      %s30 = ssub.s32 1024, 256
      %31 = vsyncadd [#allocation5], %s30
      %s32 = sshll.u32 [#allocation4], 4
      %s33 = int_to_ptr.vmem [resolvable:$true] %s32
      %38 = dma.hbm_to_vmem [thread:$0]  %s0, 256, %s33, [#allocation5], 128, 128, 8
    $region5: #{_lambda_.1} parent=1 // pred_fallthru
      _
    // Predicated region
    $region6: #{_lambda_.1} parent=1 // pred_check
      _
    $region7: #{_lambda_.1} parent=1 // pred_check_branch
      %40 = sbr.rel (0) target = $region9
    $region8: #{_lambda_.1} parent=1 // pred_region
      %s42 = ssub.s32 1024, 256
      %43 = vsyncadd [#allocation7], %s42
      %s44 = sshll.u32 [#allocation6], 4
      %s45 = int_to_ptr.vmem [resolvable:$true] %s44
      %50 = dma.hbm_to_vmem [thread:$0]  %s1, 256, %s45, [#allocation7], 128, 128, 8
    $region9: #{_lambda_.1} parent=1 // pred_fallthru
      _
    // Predicated region
    $region10: #{_lambda_.1} parent=1 // pred_check
      _
    $region11: #{_lambda_.1} parent=1 // pred_check_branch
      %52 = sbr.rel (0) target = $region13
    $region12: #{_lambda_.1} parent=1 // pred_region
      %s54 = ssub.s32 128, 32
      %55 = vsyncadd [#allocation7], %s54
      %s56 = sshll.u32 [#allocation8], 4
      %s57 = int_to_ptr.vmem [resolvable:$true] %s56
      %62 = dma.hbm_to_vmem [thread:$0]  %s2, 32, %s57, [#allocation7], 32, 32, 2
    $region13: #{_lambda_.1} parent=1 // pred_fallthru
      _
    // Predicated region
    $region14: #{_lambda_.1} parent=1 // pred_check
      _
    $region15: #{_lambda_.1} parent=1 // pred_check_branch
      %64 = sbr.rel (0) target = $region17
    $region16: #{_lambda_.1} parent=1 // pred_region
      %s66 = ssub.s32 192, 192
      %67 = vsyncadd [#allocation10], %s66
      %s68 = sshll.u32 [#allocation9], 4
      %s69 = int_to_ptr.vmem [resolvable:$true] %s68
      %74 = dma.hbm_to_vmem [thread:$0]  %s3, 192, %s69, [#allocation10], 64, 64, 4
    $region17: #{_lambda_.1} parent=1 // pred_fallthru
      _
    // Predicated region
    $region18: #{_lambda_.1} parent=1 // pred_check
      _
    $region19: #{_lambda_.1} parent=1 // pred_check_branch
      %76 = sbr.rel (0) target = $region21
    $region20: #{_lambda_.1} parent=1 // pred_region
      %s78 = ssub.s32 16, 16
      %79 = vsyncadd [#allocation10], %s78
      %s81 = sshll.u32 [#allocation11], 4
      %s82 = int_to_ptr.vmem [resolvable:$true] %s81
      %84 = dma.hbm_to_vmem [thread:$0]  %s4, 16, %s82, [#allocation10]
    $region21: #{_lambda_.1} parent=1 // pred_fallthru
      _
    // Predicated region
    $region22: #{_lambda_.1} parent=1 // pred_check
      _
    $region23: #{_lambda_.1} parent=1 // pred_check_branch
      %86 = sbr.rel (0) target = $region25
    $region24: #{_lambda_.1} parent=1 // pred_region
      _
    $region25: #{_lambda_.1} parent=1 // pred_fallthru
      _
    // Predicated region
    $region26: #{_lambda_.1} parent=1 // pred_check
      _
    $region27: #{_lambda_.1} parent=1 // pred_check_branch
      %88 = sbr.rel (0) target = $region29
    $region28: #{_lambda_.1} parent=1 // pred_region
      %s90 = ssub.s32 16, 16
      %91 = vsyncadd [#allocation13], %s90
      %s93 = sshll.u32 [#allocation12], 4
      %s94 = int_to_ptr.vmem [resolvable:$true] %s93
      %96 = dma.hbm_to_vmem [thread:$0]  %s6, 16, %s94, [#allocation13]
    $region29: #{_lambda_.1} parent=1 // pred_fallthru
      _
    // Predicated region
    $region30: #{_lambda_.1} parent=1 // pred_check
      _
    $region31: #{_lambda_.1} parent=1 // pred_check_branch
      %98 = sbr.rel (0) target = $region33
    $region32: #{_lambda_.1} parent=1 // pred_region
      %s100 = ssub.s32 128, 128
      %101 = vsyncadd [#allocation13], %s100
      %s102 = sshll.u32 [#allocation14], 4
      %s103 = int_to_ptr.vmem [resolvable:$true] %s102
      %108 = dma.hbm_to_vmem [thread:$0]  %s7, 128, %s103, [#allocation13], 64, 64, 4
    $region33: #{_lambda_.1} parent=1 // pred_fallthru
      _
    // Predicated region
    $region34: #{_lambda_.1} parent=1 // pred_check
      _
    $region35: #{_lambda_.1} parent=1 // pred_check_branch
      %110 = sbr.rel (0) target = $region37
    $region36: #{_lambda_.1} parent=1 // pred_region
      %s112 = ssub.s32 16, 16
      %113 = vsyncadd [#allocation16], %s112
      %s115 = sshll.u32 [#allocation15], 4
      %s116 = int_to_ptr.vmem [resolvable:$true] %s115
      %118 = dma.hbm_to_vmem [thread:$0]  %s8, 16, %s116, [#allocation16]
    $region37: #{_lambda_.1} parent=1 // pred_fallthru
      _
    // Predicated region
    $region38: #{_lambda_.1} parent=1 // pred_check
      _
    $region39: #{_lambda_.1} parent=1 // pred_check_branch
      %120 = sbr.rel (0) target = $region41
    $region40: #{_lambda_.1} parent=1 // pred_region
      %s122 = ssub.s32 256, 256
      %123 = vsyncadd [#allocation16], %s122
      %s124 = sshll.u32 [#allocation17], 4
      %s125 = int_to_ptr.vmem [resolvable:$true] %s124
      %130 = dma.hbm_to_vmem [thread:$0]  %s9, 256, %s125, [#allocation16], 64, 64, 4
    $region41: #{_lambda_.1} parent=1 // pred_fallthru
      _
    // Predicated region
    $region42: #{_lambda_.1} parent=1 // pred_check
      _
    $region43: #{_lambda_.1} parent=1 // pred_check_branch
      %132 = sbr.rel (0) target = $region45
    $region44: #{_lambda_.1} parent=1 // pred_region
      %s134 = ssub.s32 256, 256
      %135 = vsyncadd [#allocation19], %s134
      %s136 = sshll.u32 [#allocation18], 4
      %s137 = int_to_ptr.vmem [resolvable:$true] %s136
      %142 = dma.hbm_to_vmem [thread:$0]  %s10, 256, %s137, [#allocation19], 64, 64, 4
    $region45: #{_lambda_.1} parent=1 // pred_fallthru
      _
    // Predicated region
    $region46: #{_lambda_.1} parent=1 // pred_check
      _
    $region47: #{_lambda_.1} parent=1 // pred_check_branch
      %144 = sbr.rel (0) target = $region49
    $region48: #{_lambda_.1} parent=1 // pred_region
      _
    $region49: #{_lambda_.1} parent=1 // pred_fallthru
      _
    // Predicated region
    $region50: #{_lambda_.1} parent=1 // pred_check
      _
    $region51: #{_lambda_.1} parent=1 // pred_check_branch
      %146 = sbr.rel (0) target = $region53
    $region52: #{_lambda_.1} parent=1 // pred_region
      %s148 = ssub.s32 16, 16
      %149 = vsyncadd [#allocation19], %s148
      %s151 = sshll.u32 [#allocation20], 4
      %s152 = int_to_ptr.vmem [resolvable:$true] %s151
      %154 = dma.hbm_to_vmem [thread:$0]  %s12, 16, %s152, [#allocation19]
    $region53: #{_lambda_.1} parent=1 // pred_fallthru
      _
    // Predicated region
    $region54: #{_lambda_.1} parent=1 // pred_check
      _
    $region55: #{_lambda_.1} parent=1 // pred_check_branch
      %156 = sbr.rel (0) target = $region57
    $region56: #{_lambda_.1} parent=1 // pred_region
      _
    $region57: #{_lambda_.1} parent=1 // pred_fallthru
      _
    // Predicated region
    $region58: #{_lambda_.1} parent=1 // pred_check
      _
    $region59: #{_lambda_.1} parent=1 // pred_check_branch
      %158 = sbr.rel (0) target = $region61
    $region60: #{_lambda_.1} parent=1 // pred_region
      %s160 = ssub.s32 16, 16
      %161 = vsyncadd [#allocation22], %s160
      %s163 = sshll.u32 [#allocation21], 4
      %s164 = int_to_ptr.vmem [resolvable:$true] %s163
      %166 = dma.hbm_to_vmem [thread:$0]  %s14, 16, %s164, [#allocation22]
    $region61: #{_lambda_.1} parent=1 // pred_fallthru
      _
    // Predicated region
    $region62: #{_lambda_.1} parent=1 // pred_check
      _
    $region63: #{_lambda_.1} parent=1 // pred_check_branch
      %168 = sbr.rel (0) target = $region65
    $region64: #{_lambda_.1} parent=1 // pred_region
      %169 = dma.done [#allocation5], 1024
    $region65: #{_lambda_.1} parent=1 // pred_fallthru
      _
    // Predicated region
    $region66: #{_lambda_.1} parent=1 // pred_check
      _
    $region67: #{_lambda_.1} parent=1 // pred_check_branch
      %171 = sbr.rel (0) target = $region69
    $region68: #{_lambda_.1} parent=1 // pred_region
      %172 = dma.done [#allocation7], 1024
    $region69: #{_lambda_.1} parent=1 // pred_fallthru
      _
    // Predicated region
    $region70: #{_lambda_.1} parent=1 // pred_check
      _
    $region71: #{_lambda_.1} parent=1 // pred_check_branch
      %174 = sbr.rel (0) target = $region73
    $region72: #{_lambda_.1} parent=1 // pred_region
      %175 = dma.done [#allocation7], 128
    $region73: #{_lambda_.1} parent=1 // pred_fallthru
      _
    // Predicated region
    $region74: #{_lambda_.1} parent=1 // pred_check
      _
    $region75: #{_lambda_.1} parent=1 // pred_check_branch
      %177 = sbr.rel (0) target = $region77
    $region76: #{_lambda_.1} parent=1 // pred_region
      %178 = dma.done [#allocation10], 192
    $region77: #{_lambda_.1} parent=1 // pred_fallthru
      _
    // Predicated region
    $region78: #{_lambda_.1} parent=1 // pred_check
      _
    $region79: #{_lambda_.1} parent=1 // pred_check_branch
      %180 = sbr.rel (0) target = $region81
    $region80: #{_lambda_.1} parent=1 // pred_region
      %181 = dma.done [#allocation10], 16
    $region81: #{_lambda_.1} parent=1 // pred_fallthru
      _
    // Predicated region
    $region82: #{_lambda_.1} parent=1 // pred_check
      _
    $region83: #{_lambda_.1} parent=1 // pred_check_branch
      %183 = sbr.rel (0) target = $region85
    $region84: #{_lambda_.1} parent=1 // pred_region
      %184 = dma.done [#allocation13], 16
    $region85: #{_lambda_.1} parent=1 // pred_fallthru
      _
    // Predicated region
    $region86: #{_lambda_.1} parent=1 // pred_check
      _
    $region87: #{_lambda_.1} parent=1 // pred_check_branch
      %186 = sbr.rel (0) target = $region89
    $region88: #{_lambda_.1} parent=1 // pred_region
      %187 = dma.done [#allocation13], 128
    $region89: #{_lambda_.1} parent=1 // pred_fallthru
      _
    // Predicated region
    $region90: #{_lambda_.1} parent=1 // pred_check
      _
    $region91: #{_lambda_.1} parent=1 // pred_check_branch
      %189 = sbr.rel (0) target = $region93
    $region92: #{_lambda_.1} parent=1 // pred_region
      %190 = dma.done [#allocation16], 16
    $region93: #{_lambda_.1} parent=1 // pred_fallthru
      _
    // Predicated region
    $region94: #{_lambda_.1} parent=1 // pred_check
      _
    $region95: #{_lambda_.1} parent=1 // pred_check_branch
      %192 = sbr.rel (0) target = $region97
    $region96: #{_lambda_.1} parent=1 // pred_region
      %193 = dma.done [#allocation16], 256
    $region97: #{_lambda_.1} parent=1 // pred_fallthru
      _
    // Predicated region
    $region98: #{_lambda_.1} parent=1 // pred_check
      _
    $region99: #{_lambda_.1} parent=1 // pred_check_branch
      %195 = sbr.rel (0) target = $region101
    $region100: #{_lambda_.1} parent=1 // pred_region
      %196 = dma.done [#allocation19], 256
    $region101: #{_lambda_.1} parent=1 // pred_fallthru
      _
    // Predicated region
    $region102: #{_lambda_.1} parent=1 // pred_check
      _
    $region103: #{_lambda_.1} parent=1 // pred_check_branch
      %198 = sbr.rel (0) target = $region105
    $region104: #{_lambda_.1} parent=1 // pred_region
      %199 = dma.done [#allocation19], 16
    $region105: #{_lambda_.1} parent=1 // pred_fallthru
      _
    // Predicated region
    $region106: #{_lambda_.1} parent=1 // pred_check
      _
    $region107: #{_lambda_.1} parent=1 // pred_check_branch
      %201 = sbr.rel (0) target = $region109
    $region108: #{_lambda_.1} parent=1 // pred_region
      %202 = dma.done [#allocation22], 16
    $region109: #{_lambda_.1} parent=1 // pred_fallthru
      _
    %p204 = scmp.eq.s32.totalorder 0, 0
    // Predicated region
    $region110: #{_lambda_.1} parent=1 // pred_check
      %p205 = pneg %p204
    $region111: #{_lambda_.1} parent=1 // pred_check_branch
      %207 = sbr.rel (%p205) target = $region113
    $region112: #{_lambda_.1} parent=1 // pred_region
      %vm208 = vcmask 195584
      %209 = vst.msk [vmem:[#allocation2] sm:$0xff] %vm208, 0.0
      %vm210 = vcmask 326656
      %211 = vst.msk [vmem:[#allocation3] sm:$0xff] %vm210, 0.0
    $region113: #{_lambda_.1} parent=1 // pred_fallthru
      _
    %v212 = vld [vmem:[#allocation2] sm:$0xff]
    %v213 = vld [vmem:[#allocation4] sm:$0xff]
    %v214 = vld [vmem:[#allocation4 + $0x8] sm:$0xff]
    %v215 = vld [vmem:[#allocation4 + $0x10] sm:$0xff]
    %v216 = vld [vmem:[#allocation4 + $0x18] sm:$0xff]
    %v217 = vld [vmem:[#allocation4 + $0x20] sm:$0xff]
    %v218 = vld [vmem:[#allocation4 + $0x28] sm:$0xff]
    %v219 = vld [vmem:[#allocation4 + $0x30] sm:$0xff]
    %v220 = vld [vmem:[#allocation4 + $0x38] sm:$0xff]
    %vm221 = vcmask 195584
    %v222 = vsel %vm221, %v213, 0.0
    %v223 = vrot.slane %v222, 4
    %v224 = vadd.f32 %v222, %v223
    %v225 = vrot.slane %v224, 2
    %v226 = vadd.f32 %v224, %v225
    %v227 = vrot.slane %v226, 1
    %v228 = vadd.f32 %v226, %v227
    %v229 = vsel %vm221, %v214, 0.0
    %v230 = vrot.slane %v229, 4
    %v231 = vadd.f32 %v229, %v230
    %v232 = vrot.slane %v231, 2
    %v233 = vadd.f32 %v231, %v232
    %v234 = vrot.slane %v233, 1
    %v235 = vadd.f32 %v233, %v234
    %v236 = vsel %vm221, %v215, 0.0
    %v237 = vrot.slane %v236, 4
    %v238 = vadd.f32 %v236, %v237
    %v239 = vrot.slane %v238, 2
    %v240 = vadd.f32 %v238, %v239
    %v241 = vrot.slane %v240, 1
    %v242 = vadd.f32 %v240, %v241
    %v243 = vsel %vm221, %v216, 0.0
    %v244 = vrot.slane %v243, 4
    %v245 = vadd.f32 %v243, %v244
    %v246 = vrot.slane %v245, 2
    %v247 = vadd.f32 %v245, %v246
    %v248 = vrot.slane %v247, 1
    %v249 = vadd.f32 %v247, %v248
    %v250 = vsel %vm221, %v217, 0.0
    %v251 = vrot.slane %v250, 4
    %v252 = vadd.f32 %v250, %v251
    %v253 = vrot.slane %v252, 2
    %v254 = vadd.f32 %v252, %v253
    %v255 = vrot.slane %v254, 1
    %v256 = vadd.f32 %v254, %v255
    %v257 = vsel %vm221, %v218, 0.0
    %v258 = vrot.slane %v257, 4
    %v259 = vadd.f32 %v257, %v258
    %v260 = vrot.slane %v259, 2
    %v261 = vadd.f32 %v259, %v260
    %v262 = vrot.slane %v261, 1
    %v263 = vadd.f32 %v261, %v262
    %v264 = vsel %vm221, %v219, 0.0
    %v265 = vrot.slane %v264, 4
    %v266 = vadd.f32 %v264, %v265
    %v267 = vrot.slane %v266, 2
    %v268 = vadd.f32 %v266, %v267
    %v269 = vrot.slane %v268, 1
    %v270 = vadd.f32 %v268, %v269
    %v271 = vsel %vm221, %v220, 0.0
    %v272 = vrot.slane %v271, 4
    %v273 = vadd.f32 %v271, %v272
    %v274 = vrot.slane %v273, 2
    %v275 = vadd.f32 %v273, %v274
    %v276 = vrot.slane %v275, 1
    %v277 = vadd.f32 %v275, %v276
    %vm286 = vcmask 1041409
    %v287 = vsel %vm286, %v235, %v228
    %vm288 = vcmask 1042434
    %v289 = vsel %vm288, %v242, %v287
    %vm290 = vcmask 1043459
    %v291 = vsel %vm290, %v249, %v289
    %vm292 = vcmask 1044484
    %v293 = vsel %vm292, %v256, %v291
    %vm294 = vcmask 1045509
    %v295 = vsel %vm294, %v263, %v293
    %vm296 = vcmask 1046534
    %v297 = vsel %vm296, %v270, %v295
    %vm298 = vcmask 1047559
    %v299 = vsel %vm298, %v277, %v297
    %v301 = vadd.f32 %v212, %v299
    %302 = vst.msk [vmem:[#allocation2] sm:$0xff] %vm221, %v301
    %v303 = vld [vmem:[#allocation3] sm:$0xff]
    %v304 = vld [vmem:[#allocation6] sm:$0xff]
    %v305 = vld [vmem:[#allocation6 + $0x8] sm:$0xff]
    %v306 = vld [vmem:[#allocation6 + $0x10] sm:$0xff]
    %v307 = vld [vmem:[#allocation6 + $0x18] sm:$0xff]
    %v308 = vld [vmem:[#allocation6 + $0x20] sm:$0xff]
    %v309 = vld [vmem:[#allocation6 + $0x28] sm:$0xff]
    %v310 = vld [vmem:[#allocation6 + $0x30] sm:$0xff]
    %v311 = vld [vmem:[#allocation6 + $0x38] sm:$0xff]
    %vm312 = vcmask 326656
    %v313 = vsel %vm312, %v304, 0.0
    %v314 = vrot.slane %v313, 4
    %v315 = vadd.f32 %v313, %v314
    %v316 = vrot.slane %v315, 2
    %v317 = vadd.f32 %v315, %v316
    %v318 = vrot.slane %v317, 1
    %v319 = vadd.f32 %v317, %v318
    %v320 = vsel %vm312, %v305, 0.0
    %v321 = vrot.slane %v320, 4
    %v322 = vadd.f32 %v320, %v321
    %v323 = vrot.slane %v322, 2
    %v324 = vadd.f32 %v322, %v323
    %v325 = vrot.slane %v324, 1
    %v326 = vadd.f32 %v324, %v325
    %v327 = vsel %vm312, %v306, 0.0
    %v328 = vrot.slane %v327, 4
    %v329 = vadd.f32 %v327, %v328
    %v330 = vrot.slane %v329, 2
    %v331 = vadd.f32 %v329, %v330
    %v332 = vrot.slane %v331, 1
    %v333 = vadd.f32 %v331, %v332
    %v334 = vsel %vm312, %v307, 0.0
    %v335 = vrot.slane %v334, 4
    %v336 = vadd.f32 %v334, %v335
    %v337 = vrot.slane %v336, 2
    %v338 = vadd.f32 %v336, %v337
    %v339 = vrot.slane %v338, 1
    %v340 = vadd.f32 %v338, %v339
    %v341 = vsel %vm312, %v308, 0.0
    %v342 = vrot.slane %v341, 4
    %v343 = vadd.f32 %v341, %v342
    %v344 = vrot.slane %v343, 2
    %v345 = vadd.f32 %v343, %v344
    %v346 = vrot.slane %v345, 1
    %v347 = vadd.f32 %v345, %v346
    %v348 = vsel %vm312, %v309, 0.0
    %v349 = vrot.slane %v348, 4
    %v350 = vadd.f32 %v348, %v349
    %v351 = vrot.slane %v350, 2
    %v352 = vadd.f32 %v350, %v351
    %v353 = vrot.slane %v352, 1
    %v354 = vadd.f32 %v352, %v353
    %v355 = vsel %vm312, %v310, 0.0
    %v356 = vrot.slane %v355, 4
    %v357 = vadd.f32 %v355, %v356
    %v358 = vrot.slane %v357, 2
    %v359 = vadd.f32 %v357, %v358
    %v360 = vrot.slane %v359, 1
    %v361 = vadd.f32 %v359, %v360
    %v362 = vsel %vm312, %v311, 0.0
    %v363 = vrot.slane %v362, 4
    %v364 = vadd.f32 %v362, %v363
    %v365 = vrot.slane %v364, 2
    %v366 = vadd.f32 %v364, %v365
    %v367 = vrot.slane %v366, 1
    %v368 = vadd.f32 %v366, %v367
    %v377 = vsel %vm286, %v326, %v319
    %v378 = vsel %vm288, %v333, %v377
    %v379 = vsel %vm290, %v340, %v378
    %v380 = vsel %vm292, %v347, %v379
    %v381 = vsel %vm294, %v354, %v380
    %v382 = vsel %vm296, %v361, %v381
    %v383 = vsel %vm298, %v368, %v382
    %v385 = vadd.f32 %v303, %v383
    %386 = vst.msk [vmem:[#allocation3] sm:$0xff] %vm312, %v385
    // Predicated region
    $region114: #{_lambda_.1} parent=1 // pred_check
      %p387 = pneg %p204
    $region115: #{_lambda_.1} parent=1 // pred_check_branch
      %389 = sbr.rel (%p387) target = $region117
    $region116: #{_lambda_.1} parent=1 // pred_region
      %v390 = vld [vmem:[#allocation2] sm:$0xff]
      %v391 = vpack.c.bf16 %v390, %v390
      %v392 = vld [vmem:[#allocation9] sm:$0xf]
      %v393 = vld [vmem:[#allocation9 + $0x4] sm:$0xf]
      %v394 = vld [vmem:[#allocation9 + $0x8] sm:$0xf]
      %v395 = vld [vmem:[#allocation11] sm:$0x1]
      %v397 = vlaneseq
      %v398 = vshrl.u32 %v397, 7
      %v399 = vsub.s32 0, %v398
      %v400 = vrot.slane %v395, %v399
      %v405 = vunpack.c.l.b16 %v392
      %v406 = vunpack.c.l.b16 %v393
      %v407 = vunpack.c.l.b16 %v394
      %v408 = vpack.c.b16 %v406, %v405
      %v409 = vpack.c.b16 %v407, %v407
      %v412 = vsel %vm221, %v391, 0
      %vm414 = vcmask 1043456
      %v416 = vsel %vm414, %v409, 0
      %418 = vmatprep.subr.bf16.mxu0 0
      %419 = vmatpush1.bf16.msra.mxu0 %v408
      %420 = vmatprep.subr.bf16.mxu0 0
      %421 = vmatpush1.bf16.msra.mxu0 %v416
      %422 = vmatprep.subr.bf16.mxu0 0
      %423 = vmatpush1.bf16.msra.mxu0 0
      %424 = vmatprep.subr.bf16.mxu0 0
      %425 = vmatpush1.bf16.msra.mxu0 0
      %426 = vmatprep.subr.bf16.mxu0 0
      %427 = vmatpush1.bf16.msra.mxu0 0
      %428 = vmatprep.subr.bf16.mxu0 0
      %429 = vmatpush1.bf16.msra.mxu0 0
      %430 = vmatprep.subr.bf16.mxu0 0
      %431 = vmatpush1.bf16.msra.mxu0 0
      %432 = vmatprep.subr.bf16.mxu0 0
      %433 = vmatpush1.bf16.msra.mxu0 0
      %434 = vmatprep.subr.bf16.mxu0 0
      %435 = vmatpush1.bf16.msra.mxu0 0
      %436 = vmatprep.subr.bf16.mxu0 0
      %437 = vmatpush1.bf16.msra.mxu0 0
      %438 = vmatprep.subr.bf16.mxu0 0
      %439 = vmatpush1.bf16.msra.mxu0 0
      %440 = vmatprep.subr.bf16.mxu0 0
      %441 = vmatpush1.bf16.msra.mxu0 0
      %442 = vmatprep.subr.bf16.mxu0 0
      %443 = vmatpush1.bf16.msra.mxu0 0
      %444 = vmatprep.subr.bf16.mxu0 0
      %445 = vmatpush1.bf16.msra.mxu0 0
      %446 = vmatprep.subr.bf16.mxu0 0
      %447 = vmatpush1.bf16.msra.mxu0 0
      %448 = vmatprep.subr.bf16.mxu0 0
      %449 = vmatpush1.bf16.msra.mxu0 0
      %450 = vmatprep.mubr.bf16.mxu0 0
      %451 = vmatmul.mubr.bf16.gmra.mrb[0].mxu0 %v412
      %v452 = vpop.f32.mrb[0].mxu0
      %v453 = vadd.f32 %v400, %v452
      %v454 = vpop.f32.mrb[0].mxu0
      %v455 = vpop.f32.mrb[0].mxu0
      %v456 = vpop.f32.mrb[0].mxu0
      %457 = vdwg.mxu0
      %v458 = vmax.f32 %v453, 0.0
      %v459 = vpack.c.bf16 %v458, %v458
      %v460 = vld [vmem:[#allocation3] sm:$0xff]
      %v461 = vpack.c.bf16 %v460, %v460
      %v462 = vld [vmem:[%s5] sm:$0xf]
      %v463 = vld [vmem:[%s5 + $0x4] sm:$0xf]
      %v464 = vld [vmem:[%s5 + $0x8] sm:$0xf]
      %v465 = vld [vmem:[%s5 + $0xc] sm:$0xf]
      %v466 = vld [vmem:[%s5 + $0x10] sm:$0xf]
      %v467 = vld [vmem:[#allocation12] sm:$0x1]
      %v469 = vlaneseq
      %v470 = vshrl.u32 %v469, 7
      %v471 = vsub.s32 0, %v470
      %v472 = vrot.slane %v467, %v471
      %v479 = vunpack.c.l.b16 %v462
      %v480 = vunpack.c.l.b16 %v463
      %v481 = vunpack.c.l.b16 %v464
      %v482 = vunpack.c.l.b16 %v465
      %v483 = vunpack.c.l.b16 %v466
      %v484 = vpack.c.b16 %v480, %v479
      %v485 = vpack.c.b16 %v482, %v481
      %v486 = vpack.c.b16 %v483, %v483
      %v490 = vsel %vm312, %v461, 0
      %v493 = vsel %vm414, %v486, 0
      %495 = vmatprep.subr.bf16.mxu0 0
      %496 = vmatpush1.bf16.msra.mxu0 %v484
      %497 = vmatprep.subr.bf16.mxu0 0
      %498 = vmatpush1.bf16.msra.mxu0 %v485
      %499 = vmatprep.subr.bf16.mxu0 0
      %500 = vmatpush1.bf16.msra.mxu0 %v493
      %501 = vmatprep.subr.bf16.mxu0 0
      %502 = vmatpush1.bf16.msra.mxu0 0
      %503 = vmatprep.subr.bf16.mxu0 0
      %504 = vmatpush1.bf16.msra.mxu0 0
      %505 = vmatprep.subr.bf16.mxu0 0
      %506 = vmatpush1.bf16.msra.mxu0 0
      %507 = vmatprep.subr.bf16.mxu0 0
      %508 = vmatpush1.bf16.msra.mxu0 0
      %509 = vmatprep.subr.bf16.mxu0 0
      %510 = vmatpush1.bf16.msra.mxu0 0
      %511 = vmatprep.subr.bf16.mxu0 0
      %512 = vmatpush1.bf16.msra.mxu0 0
      %513 = vmatprep.subr.bf16.mxu0 0
      %514 = vmatpush1.bf16.msra.mxu0 0
      %515 = vmatprep.subr.bf16.mxu0 0
      %516 = vmatpush1.bf16.msra.mxu0 0
      %517 = vmatprep.subr.bf16.mxu0 0
      %518 = vmatpush1.bf16.msra.mxu0 0
      %519 = vmatprep.subr.bf16.mxu0 0
      %520 = vmatpush1.bf16.msra.mxu0 0
      %521 = vmatprep.subr.bf16.mxu0 0
      %522 = vmatpush1.bf16.msra.mxu0 0
      %523 = vmatprep.subr.bf16.mxu0 0
      %524 = vmatpush1.bf16.msra.mxu0 0
      %525 = vmatprep.subr.bf16.mxu0 0
      %526 = vmatpush1.bf16.msra.mxu0 0
      %527 = vmatprep.mubr.bf16.mxu0 0
      %528 = vmatmul.mubr.bf16.gmra.mrb[0].mxu0 %v490
      %v529 = vpop.f32.mrb[0].mxu0
      %v530 = vadd.f32 %v472, %v529
      %v531 = vpop.f32.mrb[0].mxu0
      %v532 = vpop.f32.mrb[0].mxu0
      %v533 = vpop.f32.mrb[0].mxu0
      %534 = vdwg.mxu0
      %v535 = vmax.f32 %v530, 0.0
      %v536 = vpack.c.bf16 %v535, %v535
      %v537 = vld [vmem:[#allocation8] sm:$0xff]
      %v538 = vpack.c.bf16 %v537, %v537
      %v539 = vld [vmem:[#allocation14] sm:$0xf]
      %v540 = vld [vmem:[#allocation14 + $0x4] sm:$0xf]
      %v541 = vld [vmem:[#allocation15] sm:$0x1]
      %v543 = vlaneseq
      %v544 = vshrl.u32 %v543, 7
      %v545 = vsub.s32 0, %v544
      %v546 = vrot.slane %v541, %v545
      %v550 = vunpack.c.l.b16 %v539
      %v551 = vunpack.c.l.b16 %v540
      %v552 = vpack.c.b16 %v551, %v550
      %vm554 = vcmask 130048
      %v556 = vsel %vm554, %v538, 0
      %558 = vmatprep.subr.bf16.mxu0 0
      %559 = vmatpush1.bf16.msra.mxu0 %v552
      %560 = vmatprep.subr.bf16.mxu0 0
      %561 = vmatpush1.bf16.msra.mxu0 0
      %562 = vmatprep.subr.bf16.mxu0 0
      %563 = vmatpush1.bf16.msra.mxu0 0
      %564 = vmatprep.subr.bf16.mxu0 0
      %565 = vmatpush1.bf16.msra.mxu0 0
      %566 = vmatprep.subr.bf16.mxu0 0
      %567 = vmatpush1.bf16.msra.mxu0 0
      %568 = vmatprep.subr.bf16.mxu0 0
      %569 = vmatpush1.bf16.msra.mxu0 0
      %570 = vmatprep.subr.bf16.mxu0 0
      %571 = vmatpush1.bf16.msra.mxu0 0
      %572 = vmatprep.subr.bf16.mxu0 0
      %573 = vmatpush1.bf16.msra.mxu0 0
      %574 = vmatprep.subr.bf16.mxu0 0
      %575 = vmatpush1.bf16.msra.mxu0 0
      %576 = vmatprep.subr.bf16.mxu0 0
      %577 = vmatpush1.bf16.msra.mxu0 0
      %578 = vmatprep.subr.bf16.mxu0 0
      %579 = vmatpush1.bf16.msra.mxu0 0
      %580 = vmatprep.subr.bf16.mxu0 0
      %581 = vmatpush1.bf16.msra.mxu0 0
      %582 = vmatprep.subr.bf16.mxu0 0
      %583 = vmatpush1.bf16.msra.mxu0 0
      %584 = vmatprep.subr.bf16.mxu0 0
      %585 = vmatpush1.bf16.msra.mxu0 0
      %586 = vmatprep.subr.bf16.mxu0 0
      %587 = vmatpush1.bf16.msra.mxu0 0
      %588 = vmatprep.subr.bf16.mxu0 0
      %589 = vmatpush1.bf16.msra.mxu0 0
      %590 = vmatprep.mubr.bf16.mxu0 0
      %591 = vmatmul.mubr.bf16.gmra.mrb[0].mxu0 %v556
      %v592 = vpop.f32.mrb[0].mxu0
      %v593 = vadd.f32 %v546, %v592
      %v594 = vpop.f32.mrb[0].mxu0
      %v595 = vpop.f32.mrb[0].mxu0
      %v596 = vpop.f32.mrb[0].mxu0
      %597 = vdwg.mxu0
      %v598 = vmax.f32 %v593, 0.0
      %v599 = vpack.c.bf16 %v598, %v598
      %v600 = vld [vmem:[#allocation17] sm:$0xf]
      %v601 = vld [vmem:[#allocation17 + $0x4] sm:$0xf]
      %v602 = vld [vmem:[#allocation17 + $0x8] sm:$0xf]
      %v603 = vld [vmem:[#allocation17 + $0xc] sm:$0xf]
      %v604 = vld [vmem:[#allocation18] sm:$0xf]
      %v605 = vld [vmem:[#allocation18 + $0x4] sm:$0xf]
      %v606 = vld [vmem:[#allocation18 + $0x8] sm:$0xf]
      %v607 = vld [vmem:[#allocation18 + $0xc] sm:$0xf]
      %v612 = vunpack.c.l.b16 %v604
      %v613 = vunpack.c.l.b16 %v605
      %v614 = vunpack.c.l.b16 %v606
      %v615 = vunpack.c.l.b16 %v607
      %v616 = vpack.c.b16 %v613, %v612
      %v617 = vpack.c.b16 %v615, %v614
      %vm620 = vcmask 261120
      %v622 = vsel %vm620, %v536, 0
      %624 = vmatprep.subr.bf16.mxu0 0
      %625 = vmatpush1.bf16.msra.mxu0 %v616
      %626 = vmatprep.subr.bf16.mxu0 0
      %627 = vmatpush1.bf16.msra.mxu0 %v617
      %628 = vmatprep.subr.bf16.mxu0 0
      %629 = vmatpush1.bf16.msra.mxu0 0
      %630 = vmatprep.subr.bf16.mxu0 0
      %631 = vmatpush1.bf16.msra.mxu0 0
      %632 = vmatprep.subr.bf16.mxu0 0
      %633 = vmatpush1.bf16.msra.mxu0 0
      %634 = vmatprep.subr.bf16.mxu0 0
      %635 = vmatpush1.bf16.msra.mxu0 0
      %636 = vmatprep.subr.bf16.mxu0 0
      %637 = vmatpush1.bf16.msra.mxu0 0
      %638 = vmatprep.subr.bf16.mxu0 0
      %639 = vmatpush1.bf16.msra.mxu0 0
      %640 = vmatprep.subr.bf16.mxu0 0
      %641 = vmatpush1.bf16.msra.mxu0 0
      %642 = vmatprep.subr.bf16.mxu0 0
      %643 = vmatpush1.bf16.msra.mxu0 0
      %644 = vmatprep.subr.bf16.mxu0 0
      %645 = vmatpush1.bf16.msra.mxu0 0
      %646 = vmatprep.subr.bf16.mxu0 0
      %647 = vmatpush1.bf16.msra.mxu0 0
      %648 = vmatprep.subr.bf16.mxu0 0
      %649 = vmatpush1.bf16.msra.mxu0 0
      %650 = vmatprep.subr.bf16.mxu0 0
      %651 = vmatpush1.bf16.msra.mxu0 0
      %652 = vmatprep.subr.bf16.mxu0 0
      %653 = vmatpush1.bf16.msra.mxu0 0
      %654 = vmatprep.subr.bf16.mxu0 0
      %655 = vmatpush1.bf16.msra.mxu0 0
      %656 = vmatprep.mubr.bf16.mxu0 0
      %657 = vmatmul.mubr.bf16.gmra.mrb[0].mxu0 %v622
      %v658 = vpop.f32.mrb[0].mxu0
      %v659 = vadd.f32 0.0, %v658
      %v660 = vpop.f32.mrb[0].mxu0
      %v661 = vpop.f32.mrb[0].mxu0
      %v662 = vpop.f32.mrb[0].mxu0
      %663 = vdwg.mxu0
      %v668 = vunpack.c.l.b16 %v600
      %v669 = vunpack.c.l.b16 %v601
      %v670 = vunpack.c.l.b16 %v602
      %v671 = vunpack.c.l.b16 %v603
      %v672 = vpack.c.b16 %v669, %v668
      %v673 = vpack.c.b16 %v671, %v670
      %v677 = vsel %vm620, %v459, 0
      %679 = vmatprep.subr.bf16.mxu0 0
      %680 = vmatpush1.bf16.msra.mxu0 %v672
      %681 = vmatprep.subr.bf16.mxu0 0
      %682 = vmatpush1.bf16.msra.mxu0 %v673
      %683 = vmatprep.subr.bf16.mxu0 0
      %684 = vmatpush1.bf16.msra.mxu0 0
      %685 = vmatprep.subr.bf16.mxu0 0
      %686 = vmatpush1.bf16.msra.mxu0 0
      %687 = vmatprep.subr.bf16.mxu0 0
      %688 = vmatpush1.bf16.msra.mxu0 0
      %689 = vmatprep.subr.bf16.mxu0 0
      %690 = vmatpush1.bf16.msra.mxu0 0
      %691 = vmatprep.subr.bf16.mxu0 0
      %692 = vmatpush1.bf16.msra.mxu0 0
      %693 = vmatprep.subr.bf16.mxu0 0
      %694 = vmatpush1.bf16.msra.mxu0 0
      %695 = vmatprep.subr.bf16.mxu0 0
      %696 = vmatpush1.bf16.msra.mxu0 0
      %697 = vmatprep.subr.bf16.mxu0 0
      %698 = vmatpush1.bf16.msra.mxu0 0
      %699 = vmatprep.subr.bf16.mxu0 0
      %700 = vmatpush1.bf16.msra.mxu0 0
      %701 = vmatprep.subr.bf16.mxu0 0
      %702 = vmatpush1.bf16.msra.mxu0 0
      %703 = vmatprep.subr.bf16.mxu0 0
      %704 = vmatpush1.bf16.msra.mxu0 0
      %705 = vmatprep.subr.bf16.mxu0 0
      %706 = vmatpush1.bf16.msra.mxu0 0
      %707 = vmatprep.subr.bf16.mxu0 0
      %708 = vmatpush1.bf16.msra.mxu0 0
      %709 = vmatprep.subr.bf16.mxu0 0
      %710 = vmatpush1.bf16.msra.mxu0 0
      %711 = vmatprep.mubr.bf16.mxu0 0
      %712 = vmatmul.mubr.bf16.gmra.mrb[0].mxu0 %v677
      %v713 = vpop.f32.mrb[0].mxu0
      %v714 = vadd.f32 %v659, %v713
      %v715 = vpop.f32.mrb[0].mxu0
      %v716 = vpop.f32.mrb[0].mxu0
      %v717 = vpop.f32.mrb[0].mxu0
      %718 = vdwg.mxu0
      %v719 = vld [vmem:[%s11] sm:$0xf]
      %v720 = vld [vmem:[%s11 + $0x4] sm:$0xf]
      %v721 = vld [vmem:[%s11 + $0x8] sm:$0xf]
      %v722 = vld [vmem:[%s11 + $0xc] sm:$0xf]
      %v727 = vunpack.c.l.b16 %v719
      %v728 = vunpack.c.l.b16 %v720
      %v729 = vunpack.c.l.b16 %v721
      %v730 = vunpack.c.l.b16 %v722
      %v731 = vpack.c.b16 %v728, %v727
      %v732 = vpack.c.b16 %v730, %v729
      %v736 = vsel %vm620, %v599, 0
      %738 = vmatprep.subr.bf16.mxu0 0
      %739 = vmatpush1.bf16.msra.mxu0 %v731
      %740 = vmatprep.subr.bf16.mxu0 0
      %741 = vmatpush1.bf16.msra.mxu0 %v732
      %742 = vmatprep.subr.bf16.mxu0 0
      %743 = vmatpush1.bf16.msra.mxu0 0
      %744 = vmatprep.subr.bf16.mxu0 0
      %745 = vmatpush1.bf16.msra.mxu0 0
      %746 = vmatprep.subr.bf16.mxu0 0
      %747 = vmatpush1.bf16.msra.mxu0 0
      %748 = vmatprep.subr.bf16.mxu0 0
      %749 = vmatpush1.bf16.msra.mxu0 0
      %750 = vmatprep.subr.bf16.mxu0 0
      %751 = vmatpush1.bf16.msra.mxu0 0
      %752 = vmatprep.subr.bf16.mxu0 0
      %753 = vmatpush1.bf16.msra.mxu0 0
      %754 = vmatprep.subr.bf16.mxu0 0
      %755 = vmatpush1.bf16.msra.mxu0 0
      %756 = vmatprep.subr.bf16.mxu0 0
      %757 = vmatpush1.bf16.msra.mxu0 0
      %758 = vmatprep.subr.bf16.mxu0 0
      %759 = vmatpush1.bf16.msra.mxu0 0
      %760 = vmatprep.subr.bf16.mxu0 0
      %761 = vmatpush1.bf16.msra.mxu0 0
      %762 = vmatprep.subr.bf16.mxu0 0
      %763 = vmatpush1.bf16.msra.mxu0 0
      %764 = vmatprep.subr.bf16.mxu0 0
      %765 = vmatpush1.bf16.msra.mxu0 0
      %766 = vmatprep.subr.bf16.mxu0 0
      %767 = vmatpush1.bf16.msra.mxu0 0
      %768 = vmatprep.subr.bf16.mxu0 0
      %769 = vmatpush1.bf16.msra.mxu0 0
      %770 = vmatprep.mubr.bf16.mxu0 0
      %771 = vmatmul.mubr.bf16.gmra.mrb[0].mxu0 %v736
      %v772 = vpop.f32.mrb[0].mxu0
      %v773 = vadd.f32 0.0, %v772
      %v774 = vpop.f32.mrb[0].mxu0
      %v775 = vpop.f32.mrb[0].mxu0
      %v776 = vpop.f32.mrb[0].mxu0
      %777 = vdwg.mxu0
      %v778 = vadd.f32 %v714, %v773
      %v779 = vld [vmem:[#allocation20] sm:$0x1]
      %v781 = vlaneseq
      %v782 = vshrl.u32 %v781, 7
      %v783 = vsub.s32 0, %v782
      %v784 = vrot.slane %v779, %v783
      %v786 = vadd.f32 %v778, %v784
      %v787 = vmax.f32 %v786, 0.0
      %v788 = vpack.c.bf16 %v787, %v787
      %v789 = vld [vmem:[%s13] sm:$0xf]
      %v790 = vld [vmem:[%s13 + $0x4] sm:$0xf]
      %v791 = vld [vmem:[%s13 + $0x8] sm:$0xf]
      %v792 = vld [vmem:[%s13 + $0xc] sm:$0xf]
      %v793 = vld [vmem:[%s13 + $0x10] sm:$0xf]
      %v794 = vld [vmem:[%s13 + $0x14] sm:$0xf]
      %v795 = vld [vmem:[%s13 + $0x18] sm:$0xf]
      %v796 = vld [vmem:[%s13 + $0x1c] sm:$0xf]
      %v797 = vld [vmem:[#allocation21] sm:$0x1]
      %v799 = vlaneseq
      %v800 = vshrl.u32 %v799, 7
      %v801 = vsub.s32 0, %v800
      %v802 = vrot.slane %v797, %v801
      %v812 = vunpack.c.l.b16 %v789
      %v813 = vunpack.c.l.b16 %v790
      %v814 = vunpack.c.l.b16 %v791
      %v815 = vunpack.c.l.b16 %v792
      %v816 = vunpack.c.l.b16 %v793
      %v817 = vunpack.c.l.b16 %v794
      %v818 = vunpack.c.l.b16 %v795
      %v819 = vunpack.c.l.b16 %v796
      %v820 = vpack.c.b16 %v813, %v812
      %v821 = vpack.c.b16 %v815, %v814
      %v822 = vpack.c.b16 %v817, %v816
      %v823 = vpack.c.b16 %v819, %v818
      %vm828 = vcmask 523264
      %v830 = vsel %vm828, %v788, 0
      %832 = vmatprep.subr.bf16.mxu0 0
      %833 = vmatpush1.bf16.msra.mxu0 %v820
      %834 = vmatprep.subr.bf16.mxu0 0
      %835 = vmatpush1.bf16.msra.mxu0 %v821
      %836 = vmatprep.subr.bf16.mxu0 0
      %837 = vmatpush1.bf16.msra.mxu0 %v822
      %838 = vmatprep.subr.bf16.mxu0 0
      %839 = vmatpush1.bf16.msra.mxu0 %v823
      %840 = vmatprep.subr.bf16.mxu0 0
      %841 = vmatpush1.bf16.msra.mxu0 0
      %842 = vmatprep.subr.bf16.mxu0 0
      %843 = vmatpush1.bf16.msra.mxu0 0
      %844 = vmatprep.subr.bf16.mxu0 0
      %845 = vmatpush1.bf16.msra.mxu0 0
      %846 = vmatprep.subr.bf16.mxu0 0
      %847 = vmatpush1.bf16.msra.mxu0 0
      %848 = vmatprep.subr.bf16.mxu0 0
      %849 = vmatpush1.bf16.msra.mxu0 0
      %850 = vmatprep.subr.bf16.mxu0 0
      %851 = vmatpush1.bf16.msra.mxu0 0
      %852 = vmatprep.subr.bf16.mxu0 0
      %853 = vmatpush1.bf16.msra.mxu0 0
      %854 = vmatprep.subr.bf16.mxu0 0
      %855 = vmatpush1.bf16.msra.mxu0 0
      %856 = vmatprep.subr.bf16.mxu0 0
      %857 = vmatpush1.bf16.msra.mxu0 0
      %858 = vmatprep.subr.bf16.mxu0 0
      %859 = vmatpush1.bf16.msra.mxu0 0
      %860 = vmatprep.subr.bf16.mxu0 0
      %861 = vmatpush1.bf16.msra.mxu0 0
      %862 = vmatprep.subr.bf16.mxu0 0
      %863 = vmatpush1.bf16.msra.mxu0 0
      %864 = vmatprep.mubr.bf16.mxu0 0
      %865 = vmatmul.mubr.bf16.gmra.mrb[0].mxu0 %v830
      %v866 = vpop.f32.mrb[0].mxu0
      %v867 = vadd.f32 %v802, %v866
      %v868 = vpop.f32.mrb[0].mxu0
      %v869 = vpop.f32.mrb[0].mxu0
      %v870 = vpop.f32.mrb[0].mxu0
      %871 = vdwg.mxu0
      %872 = vst [vmem:[%s15] sm:$0xff] %v867
    $region117: #{_lambda_.1} parent=1 // pred_fallthru
      _
    // Predicated region
    $region118: #{_lambda_.1} parent=1 // pred_check
      _
    $region119: #{_lambda_.1} parent=1 // pred_check_branch
      %874 = sbr.rel (0) target = $region121
    $region120: #{_lambda_.1} parent=1 // pred_region
      _
    $region121: #{_lambda_.1} parent=1 // pred_fallthru
      _
    // Predicated region
    $region122: #{_lambda_.1} parent=1 // pred_check
      _
    $region123: #{_lambda_.1} parent=1 // pred_check_branch
      %876 = sbr.rel (0) target = $region125
    $region124: #{_lambda_.1} parent=1 // pred_region
      _
    $region125: #{_lambda_.1} parent=1 // pred_fallthru
      _
    %877 = vsyncpa [#allocation5], 1
    %878 = vsyncpa [#allocation7], 1
    %879 = vsyncpa [#allocation10], 1
    %880 = vsyncpa [#allocation13], 1
    %881 = vsyncpa [#allocation16], 1
    %882 = vsyncpa [#allocation19], 1
    %883 = vsyncpa [#allocation22], 1

</llo_original>
